<compile_context>
chip_gen: v7x
topology: tpu7x:2x2x1
jax: 0.10.0
libtpu: 0.0.40
codegen_flags: <defaults>
</compile_context>

<pallas_src>
import jax
import jax.numpy as jnp
from jax.experimental import pallas as pl
from jax.experimental.pallas import tpu as pltpu

H1, H2 = 64, 32  # hidden widths fixed by the PyTorch module


def _round_up(n, m):
    return ((n + m - 1) // m) * m


def _mlp_kernel(x_ref, w1_ref, b1_ref, w2_ref, b2_ref, w3_ref, b3_ref, o_ref):
    # fc1 + ReLU (MXU matmul, f32 accumulate; f32 epilogue for v5e compatibility)
    h1 = jnp.dot(x_ref[...], w1_ref[...], preferred_element_type=jnp.float32)
    h1 = jnp.maximum(h1 + b1_ref[...], 0.0)
    # fc2 + ReLU
    h2 = jnp.dot(h1, w2_ref[...], preferred_element_type=jnp.float32)
    h2 = jnp.maximum(h2 + b2_ref[...], 0.0)
    # fc3 (H2 -> 1): contract w3 (1, H2) against h2's last axis so the result
    # comes out lane-dense, shape (1, block_b) with batch on the lane axis.
    out = jax.lax.dot_general(
        w3_ref[...], h2,
        dimension_numbers=(((1,), (1,)), ((), ())),
        preferred_element_type=jnp.float32)
    o_ref[...] = (out + b3_ref[...]).astype(o_ref.dtype)


def _vmem_capacity_bytes():
    try:
        cap = int(getattr(pltpu.get_tpu_info(), "vmem_capacity_bytes", 0))
        if cap > 0:
            return cap
    except Exception:
        pass
    return 64 << 20  # conservative fallback (v7x per-TC VMEM)


def _tile_vmem_bytes(bb, d_in, x_itemsize):
    """Per-tile VMEM footprint estimate for block size bb."""
    x_bytes = 2 * bb * d_in * x_itemsize                          # x double-buffer
    o_bytes = 2 * bb * 4                                          # (1, bb) out double-buffer
    interm = 4 * bb * (H1 + 2 * H2)                               # f32 h1 / h2 temporaries
    weights = 2 * 4 * (d_in * H1 + H1 + H1 * H2 + 2 * H2 + 1)     # resident W/b (default 2 bufs)
    return x_bytes + o_bytes + interm + weights


def _pick_block_b(B, d_in, x_itemsize, vmem_cap, target_tile_bytes=2 << 20):
    """D_in-aware batch tile: ~2 MiB of x per grid step, VMEM- and megacore-aware."""
    bb = max(512, target_tile_bytes // max(1, d_in * x_itemsize))
    bb = _round_up(bb, 128)
    budget = vmem_cap // 2                      # keep half of VMEM free (v7x: 32 MiB)
    while bb > 128 and _tile_vmem_bytes(bb, d_in, x_itemsize) > budget:
        bb = max(128, _round_up(bb // 2, 128))
    if B > 256:
        # v7x has 2 TensorCores: keep at least 2 parallel grid steps for sizable batches.
        bb = min(bb, _round_up(pl.cdiv(B, 2), 128))
    if bb >= B:
        bb = B                                  # single block spanning the whole (small) batch
    return bb


def complexity_nn_forward(x, params, *, block_b=None):
    """Fused ComplexityNN forward. x: (B, D_in). Returns PyTorch-style .squeeze()."""
    w1, b1, w2, b2, w3, b3 = params
    B, D_in = x.shape
    assert w3.shape[1] == 1, "lane-dense output path assumes D_out == 1"
    # TODO(synk): a D_out > 1 variant would need a (block_b, D_out) output block
    # instead of the lane-dense (1, block_b) layout used here.

    vmem_cap = _vmem_capacity_bytes()
    x_itemsize = x.dtype.itemsize
    bb = block_b if block_b is not None else _pick_block_b(B, D_in, x_itemsize, vmem_cap)
    bb = min(bb, B)
    num_blocks = pl.cdiv(B, bb)   # ragged tail handled by partial blocks (no jnp.pad)

    # W1 follows x's dtype so bf16-stored activations hit the bf16 MXU path; this
    # cast is tiny (D_in x 64) -- hot callers should cache the bf16 W1 once.
    w1_in = w1 if w1.dtype == x.dtype else w1.astype(x.dtype)
    w2_in = w2 if w2.dtype == jnp.float32 else w2.astype(jnp.float32)
    # Biases as (1, H) rows, fc3 weight as a (1, H2) row, fc3 bias as (1, 1).
    b1r = b1.reshape(1, H1).astype(jnp.float32)
    b2r = b2.reshape(1, H2).astype(jnp.float32)
    w3r = w3.T.astype(jnp.float32)                  # (1, H2)
    b3r = b3.reshape(1, 1).astype(jnp.float32)

    weight_bytes = (D_in * H1 * w1_in.dtype.itemsize
                    + (H1 * H2 + H2 + H1 + H2 + 1) * 4)
    cost = pl.CostEstimate(
        flops=2 * B * (D_in * H1 + H1 * H2 + H2),
        transcendentals=0,
        bytes_accessed=B * D_in * x_itemsize + B * 4 + weight_bytes,
    )

    vmem_limit = int(min(max(2 * _tile_vmem_bytes(bb, D_in, x_itemsize), 8 << 20),
                         int(0.75 * vmem_cap)))

    out = pl.pallas_call(
        _mlp_kernel,
        out_shape=jax.ShapeDtypeStruct((1, B), jnp.float32),
        grid_spec=pltpu.PrefetchScalarGridSpec(
            num_scalar_prefetch=0,
            grid=(num_blocks,),
            in_specs=[
                # x tile; if the x DMA is still exposed after tile-size tuning,
                # add pipeline_mode=pl.Buffered(3) here (VMEM headroom permitting).
                pl.BlockSpec((bb, D_in), lambda i: (i, 0)),
                # Weights/biases: constant block index -> VMEM-resident across
                # all batch tiles (do NOT make these per-step).
                pl.BlockSpec((D_in, H1), lambda i: (0, 0)),   # W1
                pl.BlockSpec((1, H1), lambda i: (0, 0)),      # b1
                pl.BlockSpec((H1, H2), lambda i: (0, 0)),     # W2
                pl.BlockSpec((1, H2), lambda i: (0, 0)),      # b2
                pl.BlockSpec((1, H2), lambda i: (0, 0)),      # W3 (as row)
                pl.BlockSpec((1, 1), lambda i: (0, 0)),       # b3
            ],
            # Lane-dense output: each grid step writes one contiguous (1, bb) chunk.
            out_specs=pl.BlockSpec((1, bb), lambda i: (0, i)),
        ),
        compiler_params=pltpu.CompilerParams(
            dimension_semantics=("parallel",),
            vmem_limit_bytes=vmem_limit,
        ),
        cost_estimate=cost,
    )(x, w1_in, b1r, w2_in, b2r, w3r, b3r)

    # PyTorch: return x.squeeze()  ((B,) for B > 1, scalar for B == 1)
    return jnp.squeeze(out)


def init_params(key, d_in, d_out=1):
    """nn.Linear-style init; weights stored transposed (in_features, out_features)."""
    k1, k2, k3, k4, k5, k6 = jax.random.split(key, 6)

    def lin(kw, kb, fan_in, fan_out):
        bound = 1.0 / jnp.sqrt(fan_in)
        w = jax.random.uniform(kw, (fan_in, fan_out), jnp.float32, -bound, bound)
        b = jax.random.uniform(kb, (fan_out,), jnp.float32, -bound, bound)
        return w, b

    w1, b1 = lin(k1, k2, d_in, H1)
    w2, b2 = lin(k3, k4, H1, H2)
    w3, b3 = lin(k5, k6, H2, d_out)
    return (w1, b1, w2, b2, w3, b3)


def _reference(x, params):
    w1, b1, w2, b2, w3, b3 = params
    h = jnp.maximum(x @ w1 + b1, 0.0)
    h = jnp.maximum(h @ w2 + b2, 0.0)
    return jnp.squeeze(h @ w3 + b3)


if __name__ == "__main__":
    key = jax.random.PRNGKey(0)
    kx1, kx2, kp = jax.random.split(key, 3)

    # ---- small single-tile case (matches typical per-sample feature vectors) ----
    B, D_in = 8, 32
    x = jax.random.normal(kx1, (B, D_in), dtype=jnp.float32)
    params = init_params(kp, D_in, d_out=1)

    y = jax.block_until_ready(complexity_nn_forward(x, params))
    y_ref = _reference(x, params)
    assert y.shape == (B,), y.shape
    assert jnp.allclose(y, y_ref, atol=1e-5, rtol=1e-5), "f32 mismatch vs reference"

    # ---- multi-tile path with a ragged tail (no jnp.pad; partial last block) ----
    B2, D2 = 300, 48
    x2 = jax.random.normal(kx2, (B2, D2), dtype=jnp.float32)
    params2 = init_params(jax.random.PRNGKey(1), D2, d_out=1)
    y2 = jax.block_until_ready(complexity_nn_forward(x2, params2))   # adaptive bb -> 2 grid steps
    y2_ref = _reference(x2, params2)
    assert y2.shape == (B2,), y2.shape
    assert jnp.allclose(y2, y2_ref, atol=1e-5, rtol=1e-5), "tiled f32 mismatch vs reference"

    # ---- explicit small block override (exercises >2 grid steps + masked tail) ----
    y2b = jax.block_until_ready(complexity_nn_forward(x2, params2, block_b=128))
    assert jnp.allclose(y2b, y2_ref, atol=1e-5, rtol=1e-5), "block_b=128 mismatch vs reference"

    # ---- x already stored bf16 in HBM (bf16 MXU feed, f32 accumulate/epilogue) ----
    x_bf16 = x.astype(jnp.bfloat16)          # simulates a bf16-resident activation store
    y_bf16 = jax.block_until_ready(complexity_nn_forward(x_bf16, params))
    assert y_bf16.shape == (B,), y_bf16.shape
    assert jnp.allclose(y_bf16, y_ref, atol=5e-2, rtol=5e-2), "bf16 mismatch vs reference"

    print("KERNEL_OK")
</pallas_src>

<mosaic_0001>
module attributes {stable_mosaic.version = 11 : i64} {
  func.func @_mlp_kernel(%arg0: i32, %arg1: memref<8x32xf32, #tpu.memory_space<vmem>>, %arg2: memref<32x64xf32, #tpu.memory_space<vmem>>, %arg3: memref<1x64xf32, #tpu.memory_space<vmem>>, %arg4: memref<64x32xf32, #tpu.memory_space<vmem>>, %arg5: memref<1x32xf32, #tpu.memory_space<vmem>>, %arg6: memref<1x32xf32, #tpu.memory_space<vmem>>, %arg7: memref<1x1xf32, #tpu.memory_space<vmem>>, %arg8: memref<1x8xf32, #tpu.memory_space<vmem>>) attributes {dimension_semantics = [#tpu.dimension_semantics<parallel>], iteration_bounds = array<i64: 1>, scalar_prefetch = 0 : i64, scratch_operands = 0 : i64, tpu.core_type = #tpu.core_type<tc>, window_params = [{transform_indices = @transform_0, window_bounds = array<i64: 8, 32>}, {pipeline_mode = #tpu.pipeline_mode<synchronous>, transform_indices = @transform_1, window_bounds = array<i64: 32, 64>}, {pipeline_mode = #tpu.pipeline_mode<synchronous>, transform_indices = @transform_2, window_bounds = array<i64: 1, 64>}, {pipeline_mode = #tpu.pipeline_mode<synchronous>, transform_indices = @transform_3, window_bounds = array<i64: 64, 32>}, {pipeline_mode = #tpu.pipeline_mode<synchronous>, transform_indices = @transform_4, window_bounds = array<i64: 1, 32>}, {pipeline_mode = #tpu.pipeline_mode<synchronous>, transform_indices = @transform_5, window_bounds = array<i64: 1, 32>}, {pipeline_mode = #tpu.pipeline_mode<synchronous>, transform_indices = @transform_6, window_bounds = array<i64: 1, 1>}, {transform_indices = @transform_7, window_bounds = array<i64: 1, 8>}]} {
    %c0 = arith.constant 0 : index
    %c0_0 = arith.constant 0 : index
    %0 = vector.load %arg1[%c0, %c0_0] : memref<8x32xf32, #tpu.memory_space<vmem>>, vector<8x32xf32>
    %c0_1 = arith.constant 0 : index
    %c0_2 = arith.constant 0 : index
    %1 = vector.load %arg2[%c0_1, %c0_2] : memref<32x64xf32, #tpu.memory_space<vmem>>, vector<32x64xf32>
    %cst = arith.constant dense<0.000000e+00> : vector<8x64xf32>
    %2 = tpu.matmul %0, %1, %cst {dimension_numbers = #tpu.dot_dimension_numbers<[1], [0], [0], [1], [0, 0, 1, 1], [], []>} : vector<8x32xf32>, vector<32x64xf32>, vector<8x64xf32> -> vector<8x64xf32>
    %c0_3 = arith.constant 0 : index
    %c0_4 = arith.constant 0 : index
    %3 = vector.load %arg3[%c0_3, %c0_4] : memref<1x64xf32, #tpu.memory_space<vmem>>, vector<1x64xf32>
    %4 = vector.broadcast %3 : vector<1x64xf32> to vector<8x64xf32>
    %5 = arith.addf %2, %4 : vector<8x64xf32>
    %cst_5 = arith.constant 0.000000e+00 : f32
    %6 = vector.broadcast %cst_5 : f32 to vector<8x64xf32>
    %7 = arith.maximumf %5, %6 : vector<8x64xf32>
    %c0_6 = arith.constant 0 : index
    %c0_7 = arith.constant 0 : index
    %8 = vector.load %arg4[%c0_6, %c0_7] : memref<64x32xf32, #tpu.memory_space<vmem>>, vector<64x32xf32>
    %cst_8 = arith.constant dense<0.000000e+00> : vector<8x32xf32>
    %9 = tpu.matmul %7, %8, %cst_8 {dimension_numbers = #tpu.dot_dimension_numbers<[1], [0], [0], [1], [0, 0, 1, 1], [], []>} : vector<8x64xf32>, vector<64x32xf32>, vector<8x32xf32> -> vector<8x32xf32>
    %c0_9 = arith.constant 0 : index
    %c0_10 = arith.constant 0 : index
    %10 = vector.load %arg5[%c0_9, %c0_10] : memref<1x32xf32, #tpu.memory_space<vmem>>, vector<1x32xf32>
    %11 = vector.broadcast %10 : vector<1x32xf32> to vector<8x32xf32>
    %12 = arith.addf %9, %11 : vector<8x32xf32>
    %cst_11 = arith.constant 0.000000e+00 : f32
    %13 = vector.broadcast %cst_11 : f32 to vector<8x32xf32>
    %14 = arith.maximumf %12, %13 : vector<8x32xf32>
    %c0_12 = arith.constant 0 : index
    %c0_13 = arith.constant 0 : index
    %15 = vector.load %arg6[%c0_12, %c0_13] : memref<1x32xf32, #tpu.memory_space<vmem>>, vector<1x32xf32>
    %cst_14 = arith.constant dense<0.000000e+00> : vector<1x8xf32>
    %16 = tpu.matmul %15, %14, %cst_14 {dimension_numbers = #tpu.dot_dimension_numbers<[1], [1], [0], [0], [0, 0, 1, 0], [], []>} : vector<1x32xf32>, vector<8x32xf32>, vector<1x8xf32> -> vector<1x8xf32>
    %c0_15 = arith.constant 0 : index
    %c0_16 = arith.constant 0 : index
    %17 = vector.load %arg7[%c0_15, %c0_16] : memref<1x1xf32, #tpu.memory_space<vmem>>, vector<1x1xf32>
    %18 = vector.broadcast %17 : vector<1x1xf32> to vector<1x8xf32>
    %19 = arith.addf %16, %18 : vector<1x8xf32>
    %c0_17 = arith.constant 0 : index
    %c0_18 = arith.constant 0 : index
    %20 = vector.load %arg8[%c0_17, %c0_18] : memref<1x8xf32, #tpu.memory_space<vmem>>, vector<1x8xf32>
    tpu.vector_store %arg8[%c0_17, %c0_18], %19 {strides = array<i32>} : memref<1x8xf32, #tpu.memory_space<vmem>>, vector<1x8xf32>,
    return
  }
  func.func @transform_0(%arg0: i32) -> (i32, i32) {
    %c0_i32 = arith.constant 0 : i32
    %c0_i32_0 = arith.constant 0 : i32
    return %arg0, %c0_i32 : i32, i32
  }
  func.func @transform_1(%arg0: i32) -> (i32, i32) {
    %c0_i32 = arith.constant 0 : i32
    %c0_i32_0 = arith.constant 0 : i32
    %c0_i32_1 = arith.constant 0 : i32
    return %c0_i32, %c0_i32_0 : i32, i32
  }
  func.func @transform_2(%arg0: i32) -> (i32, i32) {
    %c0_i32 = arith.constant 0 : i32
    %c0_i32_0 = arith.constant 0 : i32
    %c0_i32_1 = arith.constant 0 : i32
    return %c0_i32, %c0_i32_0 : i32, i32
  }
  func.func @transform_3(%arg0: i32) -> (i32, i32) {
    %c0_i32 = arith.constant 0 : i32
    %c0_i32_0 = arith.constant 0 : i32
    %c0_i32_1 = arith.constant 0 : i32
    return %c0_i32, %c0_i32_0 : i32, i32
  }
  func.func @transform_4(%arg0: i32) -> (i32, i32) {
    %c0_i32 = arith.constant 0 : i32
    %c0_i32_0 = arith.constant 0 : i32
    %c0_i32_1 = arith.constant 0 : i32
    return %c0_i32, %c0_i32_0 : i32, i32
  }
  func.func @transform_5(%arg0: i32) -> (i32, i32) {
    %c0_i32 = arith.constant 0 : i32
    %c0_i32_0 = arith.constant 0 : i32
    %c0_i32_1 = arith.constant 0 : i32
    return %c0_i32, %c0_i32_0 : i32, i32
  }
  func.func @transform_6(%arg0: i32) -> (i32, i32) {
    %c0_i32 = arith.constant 0 : i32
    %c0_i32_0 = arith.constant 0 : i32
    %c0_i32_1 = arith.constant 0 : i32
    return %c0_i32, %c0_i32_0 : i32, i32
  }
  func.func @transform_7(%arg0: i32) -> (i32, i32) {
    %c0_i32 = arith.constant 0 : i32
    %c0_i32_0 = arith.constant 0 : i32
    return %c0_i32, %arg0 : i32, i32
  }
}

</mosaic_0001>

<llo_original>
// kernel: tpu_custom_call.1
$region0: #{tpu_custom_call.1}
  #allocation0 [shape = 'u32[]', space=smem, size = 0x4, offset = 0x4, fixed_abs, tag = 'smem constant byte address 0x4 - core index']
  #allocation1 [shape = 'u32[144,128]{1,0:T(1,128)}', space=vmem, size = 0x12000, scoped, tag = 'internal scratch']
  #allocation2 [shape = 'f32[1,1]{1,0:T(1,128)S(1)}', space=vmem, size = 0x200, scoped, tag = 'scoped memory for tpu_custom_call.1']
  %s0 = inlined_call_operand.vmem [shape: f32[8,32], index: 0, kind: input, shape index: {}]
  %s1 = inlined_call_operand.vmem [shape: f32[32,64], index: 1, kind: input, shape index: {}]
  %s2 = inlined_call_operand.vmem [shape: f32[1,64], index: 2, kind: input, shape index: {}]
  %s3 = inlined_call_operand.vmem [shape: f32[64,32], index: 3, kind: input, shape index: {}]
  %s4 = inlined_call_operand.vmem [shape: f32[1,32], index: 4, kind: input, shape index: {}]
  %s5 = inlined_call_operand.vmem [shape: f32[1,32], index: 5, kind: input, shape index: {}]
  %s6 = inlined_call_operand.<no memory space> [shape: f32[1,1], index: 6, kind: input, shape index: {}]
  %s7 = inlined_call_operand.hbm [shape: f32[1,8], index: 7, kind: output, shape index: {}]
  %s8 = sld [smem:[#allocation0]]
  $region38: #{tpu_custom_call.1} parent=0
    _
  %s10 = ssub.s32 1, %s8
  %s11 = scalar_select 0, %s10, %s8
  %v12 = vstv %s6
  %13 = vst [vmem:[#allocation2] sm:$0x1] %v12
  $region1: #{tpu_custom_call.1} parent=0
    #allocation3 [shape = 'u8[512]{0}', space=vmem, size = 0x400, scoped, tag = 'output window, operand 0, single buffered']
    #allocation4 [shape = 's32[1]{0}', space=sflag, size = 0x4, scoped, tag = 'scoped memory for tpu_custom_call.1']
    %14 = vsyncpa [#allocation4], 0
    // Predicated region
    $region2: #{tpu_custom_call.1} parent=1 // pred_check
      _
    $region3: #{tpu_custom_call.1} parent=1 // pred_check_branch
      %16 = sbr.rel (0) target = $region5
    $region4: #{tpu_custom_call.1} parent=1 // pred_region
      _
    $region5: #{tpu_custom_call.1} parent=1 // pred_fallthru
      _
    // Predicated region
    $region6: #{tpu_custom_call.1} parent=1 // pred_check
      _
    $region7: #{tpu_custom_call.1} parent=1 // pred_check_branch
      %18 = sbr.rel (0) target = $region9
    $region8: #{tpu_custom_call.1} parent=1 // pred_region
      _
    $region9: #{tpu_custom_call.1} parent=1 // pred_fallthru
      _
    // Predicated region
    $region10: #{tpu_custom_call.1} parent=1 // pred_check
      _
    $region11: #{tpu_custom_call.1} parent=1 // pred_check_branch
      %20 = sbr.rel (0) target = $region13
    $region12: #{tpu_custom_call.1} parent=1 // pred_region
      _
    $region13: #{tpu_custom_call.1} parent=1 // pred_fallthru
      _
    // Predicated region
    $region14: #{tpu_custom_call.1} parent=1 // pred_check
      _
    $region15: #{tpu_custom_call.1} parent=1 // pred_check_branch
      %22 = sbr.rel (0) target = $region17
    $region16: #{tpu_custom_call.1} parent=1 // pred_region
      _
    $region17: #{tpu_custom_call.1} parent=1 // pred_fallthru
      _
    // Predicated region
    $region18: #{tpu_custom_call.1} parent=1 // pred_check
      _
    $region19: #{tpu_custom_call.1} parent=1 // pred_check_branch
      %24 = sbr.rel (0) target = $region21
    $region20: #{tpu_custom_call.1} parent=1 // pred_region
      _
    $region21: #{tpu_custom_call.1} parent=1 // pred_fallthru
      _
    // Predicated region
    $region22: #{tpu_custom_call.1} parent=1 // pred_check
      _
    $region23: #{tpu_custom_call.1} parent=1 // pred_check_branch
      %26 = sbr.rel (0) target = $region25
    $region24: #{tpu_custom_call.1} parent=1 // pred_region
      _
    $region25: #{tpu_custom_call.1} parent=1 // pred_fallthru
      _
    // Predicated region
    $region26: #{tpu_custom_call.1} parent=1 // pred_check
      _
    $region27: #{tpu_custom_call.1} parent=1 // pred_check_branch
      %28 = sbr.rel (0) target = $region29
    $region28: #{tpu_custom_call.1} parent=1 // pred_region
      _
    $region29: #{tpu_custom_call.1} parent=1 // pred_fallthru
      _
    %v29 = vld [vmem:[%s0] sm:$0xff]
    %v30 = vld [vmem:[%s1] sm:$0xff]
    %v31 = vld [vmem:[%s1 + $0x8] sm:$0xff]
    %v32 = vld [vmem:[%s1 + $0x10] sm:$0xff]
    %v33 = vld [vmem:[%s1 + $0x18] sm:$0xff]
    %v34 = vld [vmem:[%s2] sm:$0x1]
    %v36 = vlaneseq
    %v37 = vshrl.u32 %v36, 7
    %v38 = vsub.s32 0, %v37
    %v39 = vrot.slane %v34, %v38
    %vm41 = vcmask 261120
    %v43 = vsel %vm41, %v29, 0
    %45 = vmatprep.subr.mxu0 0.0
    %46 = vmatpush1.msra.mxu0 %v30
    %47 = vmatprep.subr.mxu0 0.0
    %48 = vmatpush1.msra.mxu0 %v31
    %49 = vmatprep.subr.mxu0 0.0
    %50 = vmatpush1.msra.mxu0 %v32
    %51 = vmatprep.subr.mxu0 0.0
    %52 = vmatpush1.msra.mxu0 %v33
    %53 = vmatprep.subr.mxu0 0.0
    %54 = vmatpush1.msra.mxu0 0.0
    %55 = vmatprep.subr.mxu0 0.0
    %56 = vmatpush1.msra.mxu0 0.0
    %57 = vmatprep.subr.mxu0 0.0
    %58 = vmatpush1.msra.mxu0 0.0
    %59 = vmatprep.subr.mxu0 0.0
    %60 = vmatpush1.msra.mxu0 0.0
    %61 = vmatprep.subr.mxu0 0.0
    %62 = vmatpush1.msra.mxu0 0.0
    %63 = vmatprep.subr.mxu0 0.0
    %64 = vmatpush1.msra.mxu0 0.0
    %65 = vmatprep.subr.mxu0 0.0
    %66 = vmatpush1.msra.mxu0 0.0
    %67 = vmatprep.subr.mxu0 0.0
    %68 = vmatpush1.msra.mxu0 0.0
    %69 = vmatprep.subr.mxu0 0.0
    %70 = vmatpush1.msra.mxu0 0.0
    %71 = vmatprep.subr.mxu0 0.0
    %72 = vmatpush1.msra.mxu0 0.0
    %73 = vmatprep.subr.mxu0 0.0
    %74 = vmatpush1.msra.mxu0 0.0
    %75 = vmatprep.subr.mxu0 0.0
    %76 = vmatpush1.msra.mxu0 0.0
    %77 = vmatprep.subr.mxu0 0.0
    %78 = vmatpush1.msra.mxu0 0.0
    %79 = vmatprep.subr.mxu0 0.0
    %80 = vmatpush1.msra.mxu0 0.0
    %81 = vmatprep.subr.mxu0 0.0
    %82 = vmatpush1.msra.mxu0 0.0
    %83 = vmatprep.subr.mxu0 0.0
    %84 = vmatpush1.msra.mxu0 0.0
    %85 = vmatprep.subr.mxu0 0.0
    %86 = vmatpush1.msra.mxu0 0.0
    %87 = vmatprep.subr.mxu0 0.0
    %88 = vmatpush1.msra.mxu0 0.0
    %89 = vmatprep.subr.mxu0 0.0
    %90 = vmatpush1.msra.mxu0 0.0
    %91 = vmatprep.subr.mxu0 0.0
    %92 = vmatpush1.msra.mxu0 0.0
    %93 = vmatprep.subr.mxu0 0.0
    %94 = vmatpush1.msra.mxu0 0.0
    %95 = vmatprep.subr.mxu0 0.0
    %96 = vmatpush1.msra.mxu0 0.0
    %97 = vmatprep.subr.mxu0 0.0
    %98 = vmatpush1.msra.mxu0 0.0
    %99 = vmatprep.subr.mxu0 0.0
    %100 = vmatpush1.msra.mxu0 0.0
    %101 = vmatprep.subr.mxu0 0.0
    %102 = vmatpush1.msra.mxu0 0.0
    %103 = vmatprep.subr.mxu0 0.0
    %104 = vmatpush1.msra.mxu0 0.0
    %105 = vmatprep.subr.mxu0 0.0
    %106 = vmatpush1.msra.mxu0 0.0
    %107 = vmatprep.subr.mxu0 0.0
    %108 = vmatpush1.msra.mxu0 0.0
    %109 = vmatprep.mubr.f32.mxu0 0.0
    %110 = vmatmul.mubr.f32.gmra.mrb[0].mxu0 %v43
    %v111 = vpop.f32.mrb[0].mxu0
    %v112 = vadd.f32 %v39, %v111
    %v113 = vpop.f32.mrb[0].mxu0
    %114 = vdwg.mxu0
    %v115 = vmax.f32 %v112, 0.0
    %v116 = vld [vmem:[%s3] sm:$0xff]
    %v117 = vld [vmem:[%s3 + $0x8] sm:$0xff]
    %v118 = vld [vmem:[%s3 + $0x10] sm:$0xff]
    %v119 = vld [vmem:[%s3 + $0x18] sm:$0xff]
    %v120 = vld [vmem:[%s3 + $0x20] sm:$0xff]
    %v121 = vld [vmem:[%s3 + $0x28] sm:$0xff]
    %v122 = vld [vmem:[%s3 + $0x30] sm:$0xff]
    %v123 = vld [vmem:[%s3 + $0x38] sm:$0xff]
    %v124 = vld [vmem:[%s4] sm:$0x1]
    %v126 = vlaneseq
    %v127 = vshrl.u32 %v126, 7
    %v128 = vsub.s32 0, %v127
    %v129 = vrot.slane %v124, %v128
    %vm131 = vcmask 523264
    %v133 = vsel %vm131, %v115, 0
    %135 = vmatprep.subr.mxu0 0.0
    %136 = vmatpush1.msra.mxu0 %v116
    %137 = vmatprep.subr.mxu0 0.0
    %138 = vmatpush1.msra.mxu0 %v117
    %139 = vmatprep.subr.mxu0 0.0
    %140 = vmatpush1.msra.mxu0 %v118
    %141 = vmatprep.subr.mxu0 0.0
    %142 = vmatpush1.msra.mxu0 %v119
    %143 = vmatprep.subr.mxu0 0.0
    %144 = vmatpush1.msra.mxu0 %v120
    %145 = vmatprep.subr.mxu0 0.0
    %146 = vmatpush1.msra.mxu0 %v121
    %147 = vmatprep.subr.mxu0 0.0
    %148 = vmatpush1.msra.mxu0 %v122
    %149 = vmatprep.subr.mxu0 0.0
    %150 = vmatpush1.msra.mxu0 %v123
    %151 = vmatprep.subr.mxu0 0.0
    %152 = vmatpush1.msra.mxu0 0.0
    %153 = vmatprep.subr.mxu0 0.0
    %154 = vmatpush1.msra.mxu0 0.0
    %155 = vmatprep.subr.mxu0 0.0
    %156 = vmatpush1.msra.mxu0 0.0
    %157 = vmatprep.subr.mxu0 0.0
    %158 = vmatpush1.msra.mxu0 0.0
    %159 = vmatprep.subr.mxu0 0.0
    %160 = vmatpush1.msra.mxu0 0.0
    %161 = vmatprep.subr.mxu0 0.0
    %162 = vmatpush1.msra.mxu0 0.0
    %163 = vmatprep.subr.mxu0 0.0
    %164 = vmatpush1.msra.mxu0 0.0
    %165 = vmatprep.subr.mxu0 0.0
    %166 = vmatpush1.msra.mxu0 0.0
    %167 = vmatprep.subr.mxu0 0.0
    %168 = vmatpush1.msra.mxu0 0.0
    %169 = vmatprep.subr.mxu0 0.0
    %170 = vmatpush1.msra.mxu0 0.0
    %171 = vmatprep.subr.mxu0 0.0
    %172 = vmatpush1.msra.mxu0 0.0
    %173 = vmatprep.subr.mxu0 0.0
    %174 = vmatpush1.msra.mxu0 0.0
    %175 = vmatprep.subr.mxu0 0.0
    %176 = vmatpush1.msra.mxu0 0.0
    %177 = vmatprep.subr.mxu0 0.0
    %178 = vmatpush1.msra.mxu0 0.0
    %179 = vmatprep.subr.mxu0 0.0
    %180 = vmatpush1.msra.mxu0 0.0
    %181 = vmatprep.subr.mxu0 0.0
    %182 = vmatpush1.msra.mxu0 0.0
    %183 = vmatprep.subr.mxu0 0.0
    %184 = vmatpush1.msra.mxu0 0.0
    %185 = vmatprep.subr.mxu0 0.0
    %186 = vmatpush1.msra.mxu0 0.0
    %187 = vmatprep.subr.mxu0 0.0
    %188 = vmatpush1.msra.mxu0 0.0
    %189 = vmatprep.subr.mxu0 0.0
    %190 = vmatpush1.msra.mxu0 0.0
    %191 = vmatprep.subr.mxu0 0.0
    %192 = vmatpush1.msra.mxu0 0.0
    %193 = vmatprep.subr.mxu0 0.0
    %194 = vmatpush1.msra.mxu0 0.0
    %195 = vmatprep.subr.mxu0 0.0
    %196 = vmatpush1.msra.mxu0 0.0
    %197 = vmatprep.subr.mxu0 0.0
    %198 = vmatpush1.msra.mxu0 0.0
    %199 = vmatprep.mubr.f32.mxu0 0.0
    %200 = vmatmul.mubr.f32.gmra.mrb[0].mxu0 %v133
    %v201 = vpop.f32.mrb[0].mxu0
    %v202 = vadd.f32 %v129, %v201
    %v203 = vpop.f32.mrb[0].mxu0
    %204 = vdwg.mxu0
    %v205 = vmax.f32 %v202, 0.0
    %v206 = vld [vmem:[%s5] sm:$0x1]
    %v207 = vld [vmem:[#allocation2] sm:$0x1]
    %209 = vset.pattern.permute.xlu0 0
    %210 = vperm.xlu0 %209, %v207
    %v211 = vpop.permute.xlu0 %210
    %v213 = vlaneseq
    %v214 = vshrl.u32 %v213, 7
    %v215 = vsub.s32 0, %v214
    %v216 = vrot.slane %v211, %v215
    %v218 = vsel %vm41, %v206, 0
    %v221 = vsel %vm41, %v205, 0
    %223 = vmatprep.subr.mxu0 0.0
    %224 = vmatpush1.xpose.msra.mxu0 %v221
    %225 = vmatprep.subr.mxu0 0.0
    %226 = vmatpush1.xpose.msra.mxu0 0.0
    %227 = vmatprep.subr.mxu0 0.0
    %228 = vmatpush1.xpose.msra.mxu0 0.0
    %229 = vmatprep.subr.mxu0 0.0
    %230 = vmatpush1.xpose.msra.mxu0 0.0
    %231 = vmatprep.subr.mxu0 0.0
    %232 = vmatpush1.xpose.msra.mxu0 0.0
    %233 = vmatprep.subr.mxu0 0.0
    %234 = vmatpush1.xpose.msra.mxu0 0.0
    %235 = vmatprep.subr.mxu0 0.0
    %236 = vmatpush1.xpose.msra.mxu0 0.0
    %237 = vmatprep.subr.mxu0 0.0
    %238 = vmatpush1.xpose.msra.mxu0 0.0
    %239 = vmatprep.subr.mxu0 0.0
    %240 = vmatpush1.xpose.msra.mxu0 0.0
    %241 = vmatprep.subr.mxu0 0.0
    %242 = vmatpush1.xpose.msra.mxu0 0.0
    %243 = vmatprep.subr.mxu0 0.0
    %244 = vmatpush1.xpose.msra.mxu0 0.0
    %245 = vmatprep.subr.mxu0 0.0
    %246 = vmatpush1.xpose.msra.mxu0 0.0
    %247 = vmatprep.subr.mxu0 0.0
    %248 = vmatpush1.xpose.msra.mxu0 0.0
    %249 = vmatprep.subr.mxu0 0.0
    %250 = vmatpush1.xpose.msra.mxu0 0.0
    %251 = vmatprep.subr.mxu0 0.0
    %252 = vmatpush1.xpose.msra.mxu0 0.0
    %253 = vmatprep.subr.mxu0 0.0
    %254 = vmatpush1.xpose.msra.mxu0 0.0
    %255 = vmatprep.subr.mxu0 0.0
    %256 = vmatpush1.xpose.msra.mxu0 0.0
    %257 = vmatprep.subr.mxu0 0.0
    %258 = vmatpush1.xpose.msra.mxu0 0.0
    %259 = vmatprep.subr.mxu0 0.0
    %260 = vmatpush1.xpose.msra.mxu0 0.0
    %261 = vmatprep.subr.mxu0 0.0
    %262 = vmatpush1.xpose.msra.mxu0 0.0
    %263 = vmatprep.subr.mxu0 0.0
    %264 = vmatpush1.xpose.msra.mxu0 0.0
    %265 = vmatprep.subr.mxu0 0.0
    %266 = vmatpush1.xpose.msra.mxu0 0.0
    %267 = vmatprep.subr.mxu0 0.0
    %268 = vmatpush1.xpose.msra.mxu0 0.0
    %269 = vmatprep.subr.mxu0 0.0
    %270 = vmatpush1.xpose.msra.mxu0 0.0
    %271 = vmatprep.subr.mxu0 0.0
    %272 = vmatpush1.xpose.msra.mxu0 0.0
    %273 = vmatprep.subr.mxu0 0.0
    %274 = vmatpush1.xpose.msra.mxu0 0.0
    %275 = vmatprep.subr.mxu0 0.0
    %276 = vmatpush1.xpose.msra.mxu0 0.0
    %277 = vmatprep.subr.mxu0 0.0
    %278 = vmatpush1.xpose.msra.mxu0 0.0
    %279 = vmatprep.subr.mxu0 0.0
    %280 = vmatpush1.xpose.msra.mxu0 0.0
    %281 = vmatprep.subr.mxu0 0.0
    %282 = vmatpush1.xpose.msra.mxu0 0.0
    %283 = vmatprep.subr.mxu0 0.0
    %284 = vmatpush1.xpose.msra.mxu0 0.0
    %285 = vmatprep.subr.mxu0 0.0
    %286 = vmatpush1.xpose.msra.mxu0 0.0
    %287 = vmatprep.mubr.f32.mxu0 0.0
    %288 = vmatmul.mubr.f32.gmra.mrb[0].mxu0 %v218
    %v289 = vpop.f32.mrb[0].mxu0
    %v290 = vadd.f32 %v216, %v289
    %v291 = vpop.f32.mrb[0].mxu0
    %292 = vdwg.mxu0
    %vm293 = vcmask 57344
    %294 = vst.msk [vmem:[#allocation3] sm:$0x1] %vm293, %v290
    // Predicated region
    $region30: #{tpu_custom_call.1} parent=1 // pred_check
      _
    $region31: #{tpu_custom_call.1} parent=1 // pred_check_branch
      %296 = sbr.rel (0) target = $region33
    $region32: #{tpu_custom_call.1} parent=1 // pred_region
      %s298 = ssub.s32 16, 16
      %299 = vsyncadd [#allocation4], %s298
      %s301 = sshll.u32 [#allocation3], 4
      %s302 = int_to_ptr.vmem [resolvable:$true] %s301
      %304 = dma.vmem_to_hbm [thread:$0]  %s302, 16, %s7, [#allocation4]
    $region33: #{tpu_custom_call.1} parent=1 // pred_fallthru
      _
    // Predicated region
    $region34: #{tpu_custom_call.1} parent=1 // pred_check
      _
    $region35: #{tpu_custom_call.1} parent=1 // pred_check_branch
      %306 = sbr.rel (0) target = $region37
    $region36: #{tpu_custom_call.1} parent=1 // pred_region
      %307 = dma.done [#allocation4], 16
    $region37: #{tpu_custom_call.1} parent=1 // pred_fallthru
      _
    %308 = vsyncpa [#allocation4], 1

</llo_original>
